<compile_context>
chip_gen: v7x
topology: tpu7x:2x2x1
jax: 0.10.0
libtpu: 0.0.40
codegen_flags: <defaults>
</compile_context>

<pallas_src>
import functools

import jax
import jax.numpy as jnp
from jax.experimental import pallas as pl
from jax.experimental.pallas import tpu as pltpu


def _cdiv(a, b):
    return (a + b - 1) // b


def _maxout_kernel(x_ref, o_ref):
    # x_ref: (num_pieces, tm, to), pieces-major.   o_ref: (tm, to).
    num_pieces = x_ref.shape[0]
    acc = x_ref[0]
    # num_pieces is small and static -> unrolled elementwise maxima on the VPU.
    for k in range(1, num_pieces):
        acc = jnp.maximum(acc, x_ref[k])
    o_ref[...] = acc


def _choose_tiles(M, O, p, itemsize):
    """Pick (row_tile, lane_tile) so the double-buffered working set fits VMEM."""
    vmem_budget = 20 * 1024 * 1024   # fits scoped VMEM on v5e/v6e/v7x with headroom
    target_rows = 512                # ~85% of HBM roofline per measured tiling data

    # Tile the output width only when F is so large that full-O blocks would not
    # allow a few-hundred-row block.  Lane tiles stay multiples of 128.
    to = O
    per_row = 2 * (p + 1) * to * itemsize      # double-buffered input+output bytes/row
    if O > 128 and per_row * target_rows > vmem_budget:
        to = max(128,
                 (vmem_budget // (2 * (p + 1) * target_rows * itemsize)) // 128 * 128)
        per_row = 2 * (p + 1) * to * itemsize
    to = min(to, O)

    tm = min(vmem_budget // per_row, 1024)     # past ~1k rows per-step overhead is noise
    tm = (tm // 8) * 8
    if M > 8:
        # Keep at least two row blocks: lets megacore (v7x) split the parallel axis
        # and gives the pipeline something to overlap.
        tm = min(tm, 8 * _cdiv(_cdiv(M, 2), 8))
    tm = max(tm, 8)
    if tm >= M:
        tm = M                                  # full-extent block is always layout-legal
    return tm, to


@functools.partial(jax.jit, static_argnums=(1,))
def maxout(x, num_pieces):
    """Maxout over the last dimension; matches the PyTorch module exactly."""
    *lead, F = x.shape
    assert F % num_pieces == 0, "last dim must be divisible by num_pieces"
    O = F // num_pieces
    p = num_pieces

    M = 1
    for d in lead:
        M *= d

    # Free view (M, O, p) — the PyTorch view — then one XLA transpose to
    # pieces-major (p, M, O) so the kernel only touches dense, unpadded,
    # lane-dense slabs.
    # TODO(synk): fold this de-interleave into the kernel (contiguous (tm, F)
    # blocks + in-kernel lane de-interleave) to drop this extra HBM pass; Mosaic
    # has no robust lowering today for the lane-strided load / (tm, O, p) reshape
    # that would require.
    xp = jnp.transpose(x.reshape(M, O, p), (2, 0, 1))

    tm, to = _choose_tiles(M, O, p, x.dtype.itemsize)
    grid = (_cdiv(M, tm), _cdiv(O, to))

    out = pl.pallas_call(
        _maxout_kernel,
        out_shape=jax.ShapeDtypeStruct((M, O), x.dtype),
        grid_spec=pltpu.PrefetchScalarGridSpec(
            num_scalar_prefetch=0,
            grid=grid,
            in_specs=[pl.BlockSpec((p, tm, to), lambda i, j: (0, i, j))],
            out_specs=pl.BlockSpec((tm, to), lambda i, j: (i, j)),
        ),
        compiler_params=pltpu.CompilerParams(
            dimension_semantics=("parallel", "parallel"),
            vmem_limit_bytes=32 * 1024 * 1024,
        ),
    )(xp)

    return out.reshape(*lead, O)


if __name__ == "__main__":
    key = jax.random.PRNGKey(0)
    k1, k2 = jax.random.split(key)

    # Case 1: (batch=2, seq=8, features=256), num_pieces=2 -> output (2, 8, 128).
    x1 = jax.random.normal(k1, (2, 8, 256), dtype=jnp.float32)
    y1 = jax.block_until_ready(maxout(x1, 2))
    ref1 = jnp.max(x1.reshape(2, 8, 128, 2), axis=-1)
    assert y1.shape == ref1.shape, (y1.shape, ref1.shape)
    assert bool(jnp.array_equal(y1, ref1)), "mismatch vs reference (case 1)"

    # Case 2: ragged row count, num_pieces=3, output width not a multiple of 128.
    x2 = jax.random.normal(k2, (3, 5, 96), dtype=jnp.float32)
    y2 = jax.block_until_ready(maxout(x2, 3))
    ref2 = jnp.max(x2.reshape(3, 5, 32, 3), axis=-1)
    assert y2.shape == ref2.shape, (y2.shape, ref2.shape)
    assert bool(jnp.array_equal(y2, ref2)), "mismatch vs reference (case 2)"

    print("KERNEL_OK")
</pallas_src>

<mosaic_0001>
module attributes {stable_mosaic.version = 11 : i64} {
  func.func @_maxout_kernel(%arg0: i32, %arg1: i32, %arg2: memref<2x8x128xf32, #tpu.memory_space<vmem>>, %arg3: memref<8x128xf32, #tpu.memory_space<vmem>>) attributes {dimension_semantics = [#tpu.dimension_semantics<parallel>, #tpu.dimension_semantics<parallel>], iteration_bounds = array<i64: 2, 1>, scalar_prefetch = 0 : i64, scratch_operands = 0 : i64, tpu.core_type = #tpu.core_type<tc>, window_params = [{transform_indices = @transform_0, window_bounds = array<i64: 2, 8, 128>}, {transform_indices = @transform_1, window_bounds = array<i64: 8, 128>}]} {
    %c0 = arith.constant 0 : index
    %c0_0 = arith.constant 0 : index
    %c0_1 = arith.constant 0 : index
    %0 = vector.load %arg2[%c0, %c0_0, %c0_1] : memref<2x8x128xf32, #tpu.memory_space<vmem>>, vector<1x8x128xf32>
    %1 = vector.shape_cast %0 : vector<1x8x128xf32> to vector<8x128xf32>
    %c1 = arith.constant 1 : index
    %c0_2 = arith.constant 0 : index
    %c0_3 = arith.constant 0 : index
    %2 = vector.load %arg2[%c1, %c0_2, %c0_3] : memref<2x8x128xf32, #tpu.memory_space<vmem>>, vector<1x8x128xf32>
    %3 = vector.shape_cast %2 : vector<1x8x128xf32> to vector<8x128xf32>
    %4 = arith.maximumf %1, %3 : vector<8x128xf32>
    %c0_4 = arith.constant 0 : index
    %c0_5 = arith.constant 0 : index
    %5 = vector.load %arg3[%c0_4, %c0_5] : memref<8x128xf32, #tpu.memory_space<vmem>>, vector<8x128xf32>
    tpu.vector_store %arg3[%c0_4, %c0_5], %4 {strides = array<i32>} : memref<8x128xf32, #tpu.memory_space<vmem>>, vector<8x128xf32>,
    return
  }
  func.func @transform_0(%arg0: i32, %arg1: i32) -> (i32, i32, i32) {
    %c0_i32 = arith.constant 0 : i32
    %c0_i32_0 = arith.constant 0 : i32
    return %c0_i32, %arg0, %arg1 : i32, i32, i32
  }
  func.func @transform_1(%arg0: i32, %arg1: i32) -> (i32, i32) {
    %c0_i32 = arith.constant 0 : i32
    return %arg0, %arg1 : i32, i32
  }
}

</mosaic_0001>

<llo_original>
// kernel: maxout.1
$region0: #{maxout.1}
  #allocation0 [shape = 'u32[]', space=smem, size = 0x4, offset = 0x4, fixed_abs, tag = 'smem constant byte address 0x4 - core index']
  #allocation1 [shape = 'u32[144,128]{1,0:T(1,128)}', space=vmem, size = 0x12000, scoped, tag = 'internal scratch']
  %s0 = inlined_call_operand.vmem [shape: f32[2,16,128], index: 0, kind: input, shape index: {}]
  %s1 = inlined_call_operand.hbm [shape: f32[16,128], index: 1, kind: output, shape index: {}]
  %s2 = sld [smem:[#allocation0]]
  $region75: #{maxout.1} parent=0
    _
  %s4 = ssub.s32 1, %s2
  %s5 = scalar_select 0, %s4, %s2
  $region1: #{maxout.1} parent=0
    #allocation2 [shape = 'u8[16384]{0}', space=vmem, size = 0x4000, scoped, tag = 'input window, operand 0']
    #allocation3 [shape = 'u8[8192]{0}', space=vmem, size = 0x2000, scoped, tag = 'output window, operand 0']
    #allocation4 [shape = 's32[2]{0}', space=sflag, size = 0x8, scoped, tag = 'scoped memory for maxout.1']
    %6 = vsyncpa [#allocation4], 0
    %s7 = scalar_lea.sflag [#allocation4], 1
    %8 = vsyncpa %s7, 0
    loop: start=0, step=1, limit=4
    $region2: #{maxout.1} parent=1 // loop_pre_header
      _
    $region3: #{maxout.1} parent=1 // loop_header
      %s10 = sphi 0, %s14
      %p11 = scmp.ge.s32.totalorder %s10, 4
      %s17 = sphi 0, %s29
      %s18 = sphi 0, %s25
      %s19 = sphi 0, %s17
      %s20 = sphi 0, %s18
      %s21 = sphi 0, %s19
      %s22 = sphi 0, %s20
      %s34 = sphi 0, %s36
      %s37 = sphi 0, %s34
      %s38 = sphi 0, %s37
      %s54 = sphi 0, %s38
      %s62 = sphi 0, %s64
      %s65 = sphi 0, %s62
      %s66 = sphi 0, %s65
      %s82 = sphi 0, %s66
    $region4: #{maxout.1} parent=1 // loop_header_branch
      %13 = sbr.rel (%p11) target = $region8
    $region5: #{maxout.1} parent=1 // loop_body
      %s15 = ssub.s32 %s10, 1
      %s16 = ssub.s32 %s10, 2
      %s23 = sadd.s32 1, %s18
      %p24 = scmp.ge.s32.totalorder %s23, 1
      %s25 = scalar_select %p24, 0, %s23
      %s26 = sadd.s32 1, %s17
      %s27 = scalar_select %p24, %s26, %s17
      %p28 = scmp.ge.s32.totalorder %s27, 2
      %s29 = scalar_select %p28, 0, %s27
      %s30 = ssub.s32 %s17, %s29
      %s31 = ssub.s32 %s18, %s25
      %s32 = sor.u32 %s30, %s31
      %p33 = scmp.eq.s32.totalorder %s32, 0
      %s35 = sadd.s32 %s34, 1
      %s36 = scalar_select %p33, %s34, %s35
      %p39 = pneg %p33
      %p40 = scmp.eq.s32.totalorder %s10, 1
      %p41 = por %p39, %p40
      %p42 = scmp.ne.s32.totalorder %s34, %s37
      %p43 = scmp.eq.s32.totalorder %s10, 0
      %p44 = por %p42, %p43
      %p45 = scmp.ne.s32.totalorder %s34, %s37
      %p46 = scmp.eq.s32.totalorder %s15, 1
      %p47 = por %p45, %p46
      %p48 = scmp.ne.s32.totalorder %s37, %s38
      %p49 = scmp.eq.s32.totalorder %s15, 0
      %p50 = por %p48, %p49
      %p51 = scmp.ne.s32.totalorder %s37, %s38
      %p52 = scmp.eq.s32.totalorder %s16, 1
      %p53 = por %p51, %p52
      %p55 = scmp.ne.s32.totalorder %s38, %s54
      %p56 = scmp.eq.s32.totalorder %s16, 0
      %p57 = por %p55, %p56
      %s58 = ssub.s32 %s17, %s29
      %s59 = ssub.s32 %s18, %s25
      %s60 = sor.u32 %s58, %s59
      %p61 = scmp.eq.s32.totalorder %s60, 0
      %s63 = sadd.s32 %s62, 1
      %s64 = scalar_select %p61, %s62, %s63
      %p67 = pneg %p61
      %p68 = scmp.eq.s32.totalorder %s10, 1
      %p69 = por %p67, %p68
      %p70 = scmp.ne.s32.totalorder %s62, %s65
      %p71 = scmp.eq.s32.totalorder %s10, 0
      %p72 = por %p70, %p71
      %p73 = scmp.ne.s32.totalorder %s62, %s65
      %p74 = scmp.eq.s32.totalorder %s15, 1
      %p75 = por %p73, %p74
      %p76 = scmp.ne.s32.totalorder %s65, %s66
      %p77 = scmp.eq.s32.totalorder %s15, 0
      %p78 = por %p76, %p77
      %p79 = scmp.ne.s32.totalorder %s65, %s66
      %p80 = scmp.eq.s32.totalorder %s16, 1
      %p81 = por %p79, %p80
      %p83 = scmp.ne.s32.totalorder %s66, %s82
      %p84 = scmp.eq.s32.totalorder %s16, 0
      %p85 = por %p83, %p84
      %p86 = scmp.le.s32.totalorder 1, %s10
      %p87 = scmp.lt.s32.totalorder %s10, 3
      %p88 = pnand %p86, %p87
      %p89 = pneg %p88
      // Predicated region
      $region9: #{maxout.1} parent=5 // pred_check
        _
      $region10: #{maxout.1} parent=5 // pred_check_branch
        %91 = sbr.rel (%p88) target = $region12
      $region11: #{maxout.1} parent=5 // pred_region
        %s92 = ssub.s32 %s10, 1
      $region12: #{maxout.1} parent=5 // pred_fallthru
        _
      %p93 = scmp.lt.s32.totalorder %s10, 2
      // Predicated region
      $region13: #{maxout.1} parent=5 // pred_check
        %p94 = pneg %p93
      $region14: #{maxout.1} parent=5 // pred_check_branch
        %96 = sbr.rel (%p94) target = $region16
      $region15: #{maxout.1} parent=5 // pred_region
        // Predicated region
        $region17: #{maxout.1} parent=15 // pred_check
          %p97 = pneg %p44
        $region18: #{maxout.1} parent=15 // pred_check_branch
          %99 = sbr.rel (%p97) target = $region20
        $region19: #{maxout.1} parent=15 // pred_region
          %s100 = sand.u32 %s34, 1
          %s101 = sand.u32 %s34, 1
          %s102 = smul.addr %s101, 16
          %s103 = scalar_lea.vmem [#allocation2], %s102
          %s104 = sadd.s32 %s18, %s17
          %s105 = smul.addr %s104, 8
          %s106 = scalar_lea.vmem %s0, %s105
          // Predicated region
          $region21: #{maxout.1} parent=19 // pred_check
            _
          $region22: #{maxout.1} parent=19 // pred_check_branch
            %108 = sbr.rel (0) target = $region24
          $region23: #{maxout.1} parent=19 // pred_region
            // Predicated region
            $region25: #{maxout.1} parent=23 // pred_check
              _
            $region26: #{maxout.1} parent=23 // pred_check_branch
              %110 = sbr.rel (0) target = $region28
            $region27: #{maxout.1} parent=23 // pred_region
              // Predicated region
              $region40: #{maxout.1} parent=27 // pred_check
                _
              $region41: #{maxout.1} parent=27 // pred_check_branch
                %127 = sbr.rel (0) target = $region43
              $region42: #{maxout.1} parent=27 // pred_region
                loop: start=0, step=1, limit=1
                $region44: #{maxout.1} parent=42 // loop_pre_header
                  _
                $region45: #{maxout.1} parent=42 // loop_header
                  %s129 = sphi 0, %s133
                  %p130 = scmp.ge.s32.totalorder %s129, 1
                  %s134 = sphi %s106, %s106
                  %s135 = sphi %s103, %s103
                $region46: #{maxout.1} parent=42 // loop_header_branch
                  %132 = sbr.rel (%p130) target = $region50
                $region47: #{maxout.1} parent=42 // loop_body
                  %v136 = vld [vmem:[%s134] sm:$0xff]
                  %137 = vst [vmem:[%s135] sm:$0xff] %v136
                  %v138 = vld [vmem:[%s134 + $0x10] sm:$0xff]
                  %139 = vst [vmem:[%s135 + $0x8] sm:$0xff] %v138
                $region48: #{maxout.1} parent=42 // loop_footer
                  %s133 = sadd.s32 1, %s129
                $region49: #{maxout.1} parent=42 // loop_footer_branch
                  %128 = sbr.rel target = $region45
                $region50: #{maxout.1} parent=42 // loop_exit
                  _
              $region43: #{maxout.1} parent=27 // pred_fallthru
                _
              // Predicated region
              $region51: #{maxout.1} parent=27 // pred_check
                _
              $region52: #{maxout.1} parent=27 // pred_check_branch
                %141 = sbr.rel target = $region54
              $region53: #{maxout.1} parent=27 // pred_region
                _
              $region54: #{maxout.1} parent=27 // pred_fallthru
                _
            $region28: #{maxout.1} parent=23 // pred_fallthru
              _
            // Predicated region
            $region29: #{maxout.1} parent=23 // pred_check
              _
            $region30: #{maxout.1} parent=23 // pred_check_branch
              %112 = sbr.rel target = $region32
            $region31: #{maxout.1} parent=23 // pred_region
              loop: start=0, step=1, limit=1
              $region33: #{maxout.1} parent=31 // loop_pre_header
                _
              $region34: #{maxout.1} parent=31 // loop_header
                %s115 = sphi 0, %s119
                %p116 = scmp.ge.s32.totalorder %s115, 1
                %s120 = sphi %s106, %s106
                %s121 = sphi %s103, %s103
              $region35: #{maxout.1} parent=31 // loop_header_branch
                %118 = sbr.rel (%p116) target = $region39
              $region36: #{maxout.1} parent=31 // loop_body
                %v122 = vld [vmem:[%s120] sm:$0xff]
                %123 = vst [vmem:[%s121] sm:$0xff] %v122
                %v124 = vld [vmem:[%s120 + $0x10] sm:$0xff]
                %125 = vst [vmem:[%s121 + $0x8] sm:$0xff] %v124
              $region37: #{maxout.1} parent=31 // loop_footer
                %s119 = sadd.s32 1, %s115
              $region38: #{maxout.1} parent=31 // loop_footer_branch
                %114 = sbr.rel target = $region34
              $region39: #{maxout.1} parent=31 // loop_exit
                _
            $region32: #{maxout.1} parent=23 // pred_fallthru
              _
          $region24: #{maxout.1} parent=19 // pred_fallthru
            _
          %142 = vnop
        $region20: #{maxout.1} parent=15 // pred_fallthru
          _
      $region16: #{maxout.1} parent=5 // pred_fallthru
        _
      %p143 = scmp.le.s32.totalorder 1, %s10
      %p144 = scmp.lt.s32.totalorder %s10, 3
      %p145 = pnand %p143, %p144
      %p146 = pneg %p145
      // Predicated region
      $region55: #{maxout.1} parent=5 // pred_check
        _
      $region56: #{maxout.1} parent=5 // pred_check_branch
        %148 = sbr.rel (%p145) target = $region58
      $region57: #{maxout.1} parent=5 // pred_region
        %s149 = ssub.s32 %s10, 1
        %s150 = sand.u32 %s37, 1
        %s151 = sand.u32 %s37, 1
        %s152 = smul.addr %s151, 16
        %s153 = scalar_lea.vmem [#allocation2], %s152
        // Predicated region
        $region59: #{maxout.1} parent=57 // pred_check
          %p154 = pneg %p50
        $region60: #{maxout.1} parent=57 // pred_check_branch
          %156 = sbr.rel (%p154) target = $region62
        $region61: #{maxout.1} parent=57 // pred_region
          _
        $region62: #{maxout.1} parent=57 // pred_fallthru
          _
        %s157 = sand.u32 %s37, 1
        %s158 = sand.u32 %s37, 1
        %s159 = smul.addr %s158, 16
        %s160 = scalar_lea.vmem [#allocation2], %s159
        %p161 = pneg %p50
        %p162 = pneg %p47
        %p163 = pneg %p78
        %p164 = pneg %p75
        %s165 = sand.u32 %s65, 1
        %s166 = scalar_lea.sflag [#allocation4], %s165
        %s167 = sand.u32 %s65, 1
        %s168 = smul.addr %s167, 8
        %s169 = scalar_lea.vmem [#allocation3], %s168
        %v170 = vld [vmem:[%s153] sm:$0xff]
        %s171 = scalar_lea.vmem %s153, 8 [#allocation2]
        %v172 = vld [vmem:[%s171] sm:$0xff]
        %v173 = vmax.f32 %v170, %v172
        %174 = vst [vmem:[%s169] sm:$0xff] %v173
        %s175 = sand.u32 %s65, 1
        %s176 = scalar_lea.sflag [#allocation4], %s175
        %s177 = sand.u32 %s65, 1
        %s178 = smul.addr %s177, 8
        %s179 = scalar_lea.vmem [#allocation3], %s178
        // Predicated region
        $region63: #{maxout.1} parent=57 // pred_check
          %p180 = pneg %p75
        $region64: #{maxout.1} parent=57 // pred_check_branch
          %182 = sbr.rel (%p180) target = $region66
        $region65: #{maxout.1} parent=57 // pred_region
          %s184 = ssub.s32 128, 128
          %185 = vsyncadd %s176, %s184
          %s186 = sadd.s32 %s20, %s19
          %s187 = smul.addr %s186, 128
          %s188 = scalar_lea.hbm %s1, %s187
          %s190 = sshll.u32 %s179, 4
          %s191 = int_to_ptr.vmem [resolvable:$true] %s190
          %193 = dma.vmem_to_hbm [thread:$0]  %s191, 128, %s188, %s176
        $region66: #{maxout.1} parent=57 // pred_fallthru
          _
      $region58: #{maxout.1} parent=5 // pred_fallthru
        _
      %p194 = scmp.le.s32.totalorder 2, %s10
      // Predicated region
      $region67: #{maxout.1} parent=5 // pred_check
        %p195 = pneg %p194
      $region68: #{maxout.1} parent=5 // pred_check_branch
        %197 = sbr.rel (%p195) target = $region70
      $region69: #{maxout.1} parent=5 // pred_region
        %s198 = ssub.s32 %s10, 2
        // Predicated region
        $region71: #{maxout.1} parent=69 // pred_check
          %p199 = pneg %p81
        $region72: #{maxout.1} parent=69 // pred_check_branch
          %201 = sbr.rel (%p199) target = $region74
        $region73: #{maxout.1} parent=69 // pred_region
          %s202 = sand.u32 %s66, 1
          %s203 = scalar_lea.sflag [#allocation4], %s202
          %s204 = sand.u32 %s66, 1
          %s205 = smul.addr %s204, 8
          %s206 = scalar_lea.vmem [#allocation3], %s205
          %207 = dma.done %s203, 128
        $region74: #{maxout.1} parent=69 // pred_fallthru
          _
      $region70: #{maxout.1} parent=5 // pred_fallthru
        _
    $region6: #{maxout.1} parent=1 // loop_footer
      %s14 = sadd.s32 1, %s10
    $region7: #{maxout.1} parent=1 // loop_footer_branch
      %9 = sbr.rel target = $region3
    $region8: #{maxout.1} parent=1 // loop_exit
      _
    %208 = vsyncpa [#allocation4], 1
    %s209 = scalar_lea.sflag [#allocation4], 1
    %210 = vsyncpa %s209, 1

</llo_original>
